<compile_context>
chip_gen: v7x
topology: tpu7x:2x2x1
jax: 0.10.0
libtpu: 0.0.40
codegen_flags: <defaults>
</compile_context>

<pallas_src>
import math
from collections import deque

import jax
import jax.numpy as jnp
from jax.experimental import pallas as pl
from jax.experimental.pallas import tpu as pltpu

E = 8            # embedding_dims
H = 16           # hidden_size
NUM_NODES = 10   # num_nodes
K_RECENT = 5     # model's k (recent-node window)
K_NEIGH = 8      # static padding for in-neighbor slots per endpoint
M = 2 + 2 * K_NEIGH   # 18 rows: 2 endpoints + 2*K padded in-neighbor slots
SC_COLS = 8           # packed scalar columns: [dt, deg, cc, mask, cnt, 0, 0, 0]
C = 2 * E             # packed block lane width (16)

# Row offsets inside the single packed (TOTAL_ROWS, C) input block.
ROW_SC = 0            # rows  0..17 : per-node scalar stats (18 rows, 6 pad rows)
ROW_PV = 24           # rows 24..27 : [t2v_w; t2v_b; node_w; 2*node_b]  (cols 0..7)
ROW_AV = 28           # row  28     : attention v (cols 0..7)
ROW_AW = 32           # rows 32..39 : hstack(att_W1, att_W2)            (8, 16)
ROW_WT = 40           # rows 40..55 : weight[:, :2E].T                  (16, 16)
TOTAL_ROWS = ROW_WT + 2 * E   # 56


# ----------------------------- fused Pallas kernel -----------------------------

def fused_kernel(p_ref, o_ref):
    """Single-launch fused forward.

    per-node features -> decay + additive-attention weighted mean over in-neighbors
    -> relu(cat(node_feat, neigh_agg) @ weight[:, :2E].T).
    All intermediates stay in VMEM / vregs; one input DMA, one output store.
    """
    # ---- unpack the packed block (all slices are static offsets) ----
    sc = p_ref[ROW_SC:ROW_SC + M, :]                  # (18, 16)
    dt = sc[:, 0:1]                                   # time - adj_time per row
    deg = sc[:, 1:2]
    cc = sc[:, 2:3]
    mask = sc[:, 3:4]
    cnt = sc[:, 4:5]

    pvb = p_ref[ROW_PV:ROW_PV + 4, 0:E]               # (4, 8)
    tw, tb = pvb[0:1], pvb[1:2]                       # Time2Vec weight / bias
    nw, nb2 = pvb[2:3], pvb[3:4]                      # linear_node weight / 2*bias

    v_row = p_ref[ROW_AV:ROW_AV + 1, 0:E]             # (1, 8) attention v
    aw = p_ref[ROW_AW:ROW_AW + E, :]                  # (8, 16) = hstack(W1, W2)
    wt = p_ref[ROW_WT:ROW_WT + 2 * E, :]              # (16, 16) = weight[:, :2E].T

    # ---- stage 1: node_feat = F.normalize(linear_node(deg) + Time2Vec(|dt|) + linear_node(cc))
    phase = jnp.abs(dt) * tw + tb                     # (18, 8)
    col = jax.lax.broadcasted_iota(jnp.int32, phase.shape, 1)
    # TODO(synk): Time2Vec is not defined in the source; canonical 'cos' variant
    # (channel 0 linear, remaining channels cos(w*t + b)).
    t2v = jnp.where(col == 0, phase, jnp.cos(phase))
    feat = t2v + (deg + cc) * nw + nb2                # bias applied twice (two Linear calls)
    norm = jnp.sqrt(jnp.sum(feat * feat, axis=-1, keepdims=True))
    feats = feat / jnp.maximum(norm, 1e-12)           # F.normalize(dim=1, eps=1e-12)

    node_feat = feats[:2]                             # (2, 8)  endpoint features
    neigh_feat = feats[2:]                            # (16, 8) padded in-neighbor features

    # ---- stage 2: one fused MXU pass for both attention projections
    # TODO(synk): Attention is not defined in the source; canonical additive attention
    # score = v^T tanh(W1 a + W2 b).
    proj = jnp.dot(feats, aw, preferred_element_type=jnp.float32)   # (18, 16)
    a2 = proj[:2, :E]                                 # node_feat @ W1   (2, 8)
    b = proj[2:, E:]                                  # neigh_feat @ W2  (16, 8)

    row = jax.lax.broadcasted_iota(jnp.int32, (2 * K_NEIGH, E), 0)
    a_rep = jnp.where(row < K_NEIGH,
                      jnp.broadcast_to(a2[0:1], (2 * K_NEIGH, E)),
                      jnp.broadcast_to(a2[1:2], (2 * K_NEIGH, E)))   # (16, 8)
    # "@ v" done on the VPU (multiply + lane reduce) instead of a 1-wide MXU pop.
    att = jnp.sum(jnp.tanh(a_rep + b) * v_row, axis=-1, keepdims=True)   # (16, 1)

    # TODO(synk): Decayer(2, 'rev') is not defined in the source; use 1/(1 + 2*dt).
    decay = 1.0 / (1.0 + 2.0 * dt[2:])
    ts = jnp.where(decay >= 0, decay, 0.01 * decay)                   # F.leaky_relu
    w = ts * mask[2:] / cnt[2:] * att                                 # (16, 1)
    weighted = w * neigh_feat                                         # (16, 8)
    agg = jnp.concatenate(
        [jnp.sum(weighted[:K_NEIGH], axis=0, keepdims=True),
         jnp.sum(weighted[K_NEIGH:], axis=0, keepdims=True)], axis=0)  # (2, 8)

    # ---- stage 3: relu(cat(node_feat, neigh_agg, zeros_hist) @ weight.T)
    # feature_hist is zero on this call, so only weight[:, :2E].T participates.
    x2 = jnp.concatenate([node_feat, agg], axis=-1)                   # (2, 16)
    y = jnp.dot(x2, wt, preferred_element_type=jnp.float32)           # (2, 16)
    o_ref[...] = jnp.maximum(y, 0.0)                                  # single full-block store


# ----------------------------- pallas_call wrapper -----------------------------

@jax.jit
def run_model(packed):
    # No grid -> no software pipeline / double-buffering; full arrays resident in VMEM.
    return pl.pallas_call(
        fused_kernel,
        out_shape=jax.ShapeDtypeStruct((2, H), jnp.float32),
        in_specs=[pl.BlockSpec(memory_space=pltpu.MemorySpace.VMEM)],
        out_specs=pl.BlockSpec(memory_space=pltpu.MemorySpace.VMEM),
    )(packed)


# ----------------------------- host-side graph glue -----------------------------
# (networkx DiGraph / deque / clustering coefficient — no Pallas equivalent, plain Python)

class DiGraph:
    def __init__(self):
        self.succ, self.pred = {}, {}

    def add_node(self, n):
        self.succ.setdefault(n, set())
        self.pred.setdefault(n, set())

    def add_edge(self, u, v):
        self.add_node(u); self.add_node(v)
        self.succ[u].add(v); self.pred[v].add(u)

    def nodes(self):
        return list(self.succ.keys())

    def in_degree(self, n):
        return len(self.pred.get(n, ()))

    def out_degree(self, n):
        return len(self.succ.get(n, ()))

    def subgraph(self, nodes):
        g = DiGraph()
        ns = set(nodes) & set(self.succ.keys())
        for n in ns:
            g.add_node(n)
        for a in ns:
            for b in self.succ.get(a, ()):
                if b in ns:
                    g.add_edge(a, b)
        return g

    def copy(self):
        return self.subgraph(self.nodes())


def clustering_coeff(g, n):
    # TODO(synk): getCC is undefined in the source; use undirected local clustering coefficient.
    nbrs = list((g.succ.get(n, set()) | g.pred.get(n, set())) - {n})
    d = len(nbrs)
    if d < 2:
        return 0.0
    links = 0
    for i in range(d):
        for j in range(i + 1, d):
            a, b = nbrs[i], nbrs[j]
            if b in g.succ.get(a, set()) or a in g.succ.get(b, set()):
                links += 1
    return 2.0 * links / (d * (d - 1))


# ----------------------------- main -----------------------------

if __name__ == "__main__":
    key = jax.random.PRNGKey(0)
    k_w, k_nw, k_nb, k_tw, k_tb, k_a1, k_a2, k_v = jax.random.split(key, 8)

    # Deterministic parameter init (shapes from Model.__init__).
    lim_w = math.sqrt(6.0 / (H + 4 * E))
    weight = jax.random.uniform(k_w, (H, 4 * E), jnp.float32, -lim_w, lim_w)   # nn.Parameter (xavier)
    node_w = jax.random.uniform(k_nw, (1, E), jnp.float32, -1.0, 1.0)          # nn.Linear(1, E).weight.T
    node_b = jax.random.uniform(k_nb, (1, E), jnp.float32, -1.0, 1.0)          # nn.Linear(1, E).bias
    t2v_w = jax.random.uniform(k_tw, (1, E), jnp.float32, -1.0, 1.0)           # Time2Vec('cos', E)
    t2v_b = jax.random.uniform(k_tb, (1, E), jnp.float32, -1.0, 1.0)
    lim_a = math.sqrt(6.0 / (2 * E))
    att_w1 = jax.random.uniform(k_a1, (E, E), jnp.float32, -lim_a, lim_a)      # Attention(E, E, E)
    att_w2 = jax.random.uniform(k_a2, (E, E), jnp.float32, -lim_a, lim_a)
    att_v = jax.random.uniform(k_v, (E, 1), jnp.float32, -lim_a, lim_a)

    # Module state after initialize() + a few prior edges (label != 1, so state was updated).
    graph = DiGraph()
    adj_time = [0.0] * NUM_NODES
    recent = deque(maxlen=K_RECENT)
    prior_edges = [(0, 1, 1.0), (1, 2, 2.0), (2, 0, 3.0), (3, 1, 4.0), (1, 4, 5.0), (4, 2, 6.0)]
    for (a, b, t) in prior_edges:
        graph.add_edge(a, b)
        for n in (a, b):
            if n in recent:
                recent.remove(n)
            recent.append(n)
            adj_time[n] = t

    # Current forward: edge = (u, v, time), label = 0, flag = 'test'.
    u, v, t_now = 1, 2, 7.0
    graph.add_node(u); graph.add_node(v)
    sub = graph.copy() if len(recent) < K_RECENT else graph.subgraph(list(recent) + [u, v])
    graph.add_edge(u, v)
    sub.add_edge(u, v)

    n_sub = len(sub.nodes())
    targets = [u, v]

    def stats(n):
        dt = abs(t_now - adj_time[n])
        deg = (sub.in_degree(n) + sub.out_degree(n)) / (n_sub - 1)
        return dt, deg, clustering_coeff(sub, n)

    # Packed scalar rows: [dt, deg, cc, mask, cnt, 0, 0, 0].
    # Rows 0..1: the two endpoints; rows 2..: K_NEIGH padded in-neighbor slots per endpoint.
    sc_rows = []
    neigh_lists = []
    for tgt in targets:
        d, g, c = stats(tgt)
        sc_rows.append([d, g, c, 0.0, 1.0, 0.0, 0.0, 0.0])
        neigh_lists.append(sorted(sub.pred.get(tgt, set())))
    for neighs in neigh_lists:
        cnt = float(max(len(neighs), 1))
        for slot in range(K_NEIGH):
            if slot < len(neighs):
                d, g, c = stats(neighs[slot])
                m = 1.0
            else:
                d, g, c, m = 0.0, 0.0, 0.0, 0.0
            sc_rows.append([d, g, c, m, cnt, 0.0, 0.0, 0.0])

    sc = jnp.asarray(sc_rows, jnp.float32)                                     # (M, 8)
    assert sc.shape == (M, SC_COLS)

    # TODO(synk): the stateful feature_dict / nn.GRU updater only mutates module state for
    # future calls (first-seen nodes are stored directly) and does not affect this call's output.

    # -------- pack everything into ONE (TOTAL_ROWS, C) block: a single DMA --------
    pv = jnp.concatenate([t2v_w, t2v_b, node_w, 2.0 * node_b], axis=0)         # (4, 8), 2*b prefolded
    aw = jnp.concatenate([att_w1, att_w2], axis=1)                             # (8, 16) hstack(W1, W2)
    # Pre-transposed weight; history half of combined_all is zero on this call
    # (feature_dict cache miss), so only the first 2E columns of weight are used.
    wt = jnp.transpose(weight[:, :2 * E])                                      # (16, 16)

    packed = jnp.zeros((TOTAL_ROWS, C), jnp.float32)
    packed = packed.at[ROW_SC:ROW_SC + M, :SC_COLS].set(sc)
    packed = packed.at[ROW_PV:ROW_PV + 4, :E].set(pv)
    packed = packed.at[ROW_AV, :E].set(att_v[:, 0])
    packed = packed.at[ROW_AW:ROW_AW + E, :].set(aw)
    packed = packed.at[ROW_WT:ROW_WT + 2 * E, :].set(wt)

    # Single fused launch; block only on the final output.
    out = jax.block_until_ready(run_model(packed))
    assert out.shape == (2, H)
    assert bool(jnp.all(out >= 0.0))
    print("KERNEL_OK")
</pallas_src>

<mosaic_0001>
module attributes {stable_mosaic.version = 11 : i64} {
  func.func @fused_kernel(%arg0: memref<56x16xf32, #tpu.memory_space<vmem>>, %arg1: memref<2x16xf32, #tpu.memory_space<vmem>>) attributes {dimension_semantics = [], scalar_prefetch = 0 : i64, scratch_operands = 0 : i64, tpu.core_type = #tpu.core_type<tc>} {
    %c0 = arith.constant 0 : index
    %c0_0 = arith.constant 0 : index
    %0 = vector.load %arg0[%c0, %c0_0] : memref<56x16xf32, #tpu.memory_space<vmem>>, vector<18x16xf32>
    %1 = vector.extract_strided_slice %0 {offsets = [0, 0], sizes = [18, 1], strides = [1, 1]} : vector<18x16xf32> to vector<18x1xf32>
    %2 = vector.extract_strided_slice %0 {offsets = [0, 1], sizes = [18, 1], strides = [1, 1]} : vector<18x16xf32> to vector<18x1xf32>
    %3 = vector.extract_strided_slice %0 {offsets = [0, 2], sizes = [18, 1], strides = [1, 1]} : vector<18x16xf32> to vector<18x1xf32>
    %4 = vector.extract_strided_slice %0 {offsets = [0, 3], sizes = [18, 1], strides = [1, 1]} : vector<18x16xf32> to vector<18x1xf32>
    %5 = vector.extract_strided_slice %0 {offsets = [0, 4], sizes = [18, 1], strides = [1, 1]} : vector<18x16xf32> to vector<18x1xf32>
    %c24 = arith.constant 24 : index
    %c0_1 = arith.constant 0 : index
    %6 = vector.load %arg0[%c24, %c0_1] : memref<56x16xf32, #tpu.memory_space<vmem>>, vector<4x8xf32>
    %7 = vector.extract_strided_slice %6 {offsets = [0, 0], sizes = [1, 8], strides = [1, 1]} : vector<4x8xf32> to vector<1x8xf32>
    %8 = vector.extract_strided_slice %6 {offsets = [1, 0], sizes = [1, 8], strides = [1, 1]} : vector<4x8xf32> to vector<1x8xf32>
    %9 = vector.extract_strided_slice %6 {offsets = [2, 0], sizes = [1, 8], strides = [1, 1]} : vector<4x8xf32> to vector<1x8xf32>
    %10 = vector.extract_strided_slice %6 {offsets = [3, 0], sizes = [1, 8], strides = [1, 1]} : vector<4x8xf32> to vector<1x8xf32>
    %c28 = arith.constant 28 : index
    %c0_2 = arith.constant 0 : index
    %11 = vector.load %arg0[%c28, %c0_2] : memref<56x16xf32, #tpu.memory_space<vmem>>, vector<1x8xf32>
    %c32 = arith.constant 32 : index
    %c0_3 = arith.constant 0 : index
    %12 = vector.load %arg0[%c32, %c0_3] : memref<56x16xf32, #tpu.memory_space<vmem>>, vector<8x16xf32>
    %c40 = arith.constant 40 : index
    %c0_4 = arith.constant 0 : index
    %13 = vector.load %arg0[%c40, %c0_4] : memref<56x16xf32, #tpu.memory_space<vmem>>, vector<16x16xf32>
    %14 = math.absf %1 : vector<18x1xf32>
    %15 = vector.broadcast %14 : vector<18x1xf32> to vector<18x8xf32>
    %16 = vector.broadcast %7 : vector<1x8xf32> to vector<18x8xf32>
    %17 = arith.mulf %15, %16 : vector<18x8xf32>
    %18 = vector.broadcast %8 : vector<1x8xf32> to vector<18x8xf32>
    %19 = arith.addf %17, %18 : vector<18x8xf32>
    %20 = tpu.iota {dimensions = array<i32: 1>} : vector<18x8xi32>
    %c0_i32 = arith.constant 0 : i32
    %21 = vector.broadcast %c0_i32 : i32 to vector<18x8xi32>
    %22 = arith.cmpi eq, %20, %21 : vector<18x8xi32>
    %23 = math.cos %19 : vector<18x8xf32>
    %24 = arith.select %22, %19, %23 : vector<18x8xi1>, vector<18x8xf32>
    %25 = arith.addf %2, %3 : vector<18x1xf32>
    %26 = vector.broadcast %25 : vector<18x1xf32> to vector<18x8xf32>
    %27 = vector.broadcast %9 : vector<1x8xf32> to vector<18x8xf32>
    %28 = arith.mulf %26, %27 : vector<18x8xf32>
    %29 = arith.addf %24, %28 : vector<18x8xf32>
    %30 = vector.broadcast %10 : vector<1x8xf32> to vector<18x8xf32>
    %31 = arith.addf %29, %30 : vector<18x8xf32>
    %32 = arith.mulf %31, %31 : vector<18x8xf32>
    %cst = arith.constant dense<0.000000e+00> : vector<18xf32>
    %33 = vector.multi_reduction <add>, %32, %cst [1] : vector<18x8xf32> to vector<18xf32>
    %34 = vector.shape_cast %33 : vector<18xf32> to vector<18x1xf32>
    %35 = math.sqrt %34 : vector<18x1xf32>
    %cst_5 = arith.constant 9.99999996E-13 : f32
    %36 = vector.broadcast %cst_5 : f32 to vector<18x1xf32>
    %37 = arith.maximumf %35, %36 : vector<18x1xf32>
    %38 = vector.broadcast %37 : vector<18x1xf32> to vector<18x8xf32>
    %39 = arith.divf %31, %38 : vector<18x8xf32>
    %40 = vector.extract_strided_slice %39 {offsets = [0, 0], sizes = [2, 8], strides = [1, 1]} : vector<18x8xf32> to vector<2x8xf32>
    %41 = vector.extract_strided_slice %39 {offsets = [2, 0], sizes = [16, 8], strides = [1, 1]} : vector<18x8xf32> to vector<16x8xf32>
    %cst_6 = arith.constant dense<0.000000e+00> : vector<18x16xf32>
    %42 = tpu.matmul %39, %12, %cst_6 {dimension_numbers = #tpu.dot_dimension_numbers<[1], [0], [0], [1], [0, 0, 1, 1], [], []>} : vector<18x8xf32>, vector<8x16xf32>, vector<18x16xf32> -> vector<18x16xf32>
    %43 = vector.extract_strided_slice %42 {offsets = [0, 0], sizes = [2, 8], strides = [1, 1]} : vector<18x16xf32> to vector<2x8xf32>
    %44 = vector.extract_strided_slice %42 {offsets = [2, 8], sizes = [16, 8], strides = [1, 1]} : vector<18x16xf32> to vector<16x8xf32>
    %45 = tpu.iota {dimensions = array<i32: 0>} : vector<16x8xi32>
    %c8_i32 = arith.constant 8 : i32
    %46 = vector.broadcast %c8_i32 : i32 to vector<16x8xi32>
    %47 = arith.cmpi slt, %45, %46 : vector<16x8xi32>
    %48 = vector.extract_strided_slice %43 {offsets = [0, 0], sizes = [1, 8], strides = [1, 1]} : vector<2x8xf32> to vector<1x8xf32>
    %49 = vector.shape_cast %48 : vector<1x8xf32> to vector<1x8xf32>
    %50 = vector.broadcast %49 : vector<1x8xf32> to vector<16x8xf32>
    %51 = vector.extract_strided_slice %43 {offsets = [1, 0], sizes = [1, 8], strides = [1, 1]} : vector<2x8xf32> to vector<1x8xf32>
    %52 = vector.shape_cast %51 : vector<1x8xf32> to vector<1x8xf32>
    %53 = vector.broadcast %52 : vector<1x8xf32> to vector<16x8xf32>
    %54 = arith.select %47, %50, %53 : vector<16x8xi1>, vector<16x8xf32>
    %55 = arith.addf %54, %44 : vector<16x8xf32>
    %56 = math.tanh %55 : vector<16x8xf32>
    %57 = vector.broadcast %11 : vector<1x8xf32> to vector<16x8xf32>
    %58 = arith.mulf %56, %57 : vector<16x8xf32>
    %cst_7 = arith.constant dense<0.000000e+00> : vector<16xf32>
    %59 = vector.multi_reduction <add>, %58, %cst_7 [1] : vector<16x8xf32> to vector<16xf32>
    %60 = vector.shape_cast %59 : vector<16xf32> to vector<16x1xf32>
    %61 = vector.extract_strided_slice %1 {offsets = [2, 0], sizes = [16, 1], strides = [1, 1]} : vector<18x1xf32> to vector<16x1xf32>
    %cst_8 = arith.constant 2.000000e+00 : f32
    %62 = vector.broadcast %cst_8 : f32 to vector<16x1xf32>
    %63 = arith.mulf %62, %61 : vector<16x1xf32>
    %cst_9 = arith.constant 1.000000e+00 : f32
    %64 = vector.broadcast %cst_9 : f32 to vector<16x1xf32>
    %65 = arith.addf %64, %63 : vector<16x1xf32>
    %cst_10 = arith.constant 1.000000e+00 : f32
    %66 = vector.broadcast %cst_10 : f32 to vector<16x1xf32>
    %67 = arith.divf %66, %65 : vector<16x1xf32>
    %cst_11 = arith.constant 0.000000e+00 : f32
    %68 = vector.broadcast %cst_11 : f32 to vector<16x1xf32>
    %69 = arith.cmpf oge, %67, %68 : vector<16x1xf32>
    %cst_12 = arith.constant 0.00999999977 : f32
    %70 = vector.broadcast %cst_12 : f32 to vector<16x1xf32>
    %71 = arith.mulf %70, %67 : vector<16x1xf32>
    %72 = arith.select %69, %67, %71 : vector<16x1xi1>, vector<16x1xf32>
    %73 = vector.extract_strided_slice %4 {offsets = [2, 0], sizes = [16, 1], strides = [1, 1]} : vector<18x1xf32> to vector<16x1xf32>
    %74 = arith.mulf %72, %73 : vector<16x1xf32>
    %75 = vector.extract_strided_slice %5 {offsets = [2, 0], sizes = [16, 1], strides = [1, 1]} : vector<18x1xf32> to vector<16x1xf32>
    %76 = arith.divf %74, %75 : vector<16x1xf32>
    %77 = arith.mulf %76, %60 : vector<16x1xf32>
    %78 = vector.broadcast %77 : vector<16x1xf32> to vector<16x8xf32>
    %79 = arith.mulf %78, %41 : vector<16x8xf32>
    %80 = vector.extract_strided_slice %79 {offsets = [0, 0], sizes = [8, 8], strides = [1, 1]} : vector<16x8xf32> to vector<8x8xf32>
    %cst_13 = arith.constant dense<0.000000e+00> : vector<8xf32>
    %81 = vector.multi_reduction <add>, %80, %cst_13 [0] : vector<8x8xf32> to vector<8xf32>
    %82 = vector.shape_cast %81 : vector<8xf32> to vector<1x8xf32>
    %83 = vector.extract_strided_slice %79 {offsets = [8, 0], sizes = [8, 8], strides = [1, 1]} : vector<16x8xf32> to vector<8x8xf32>
    %cst_14 = arith.constant dense<0.000000e+00> : vector<8xf32>
    %84 = vector.multi_reduction <add>, %83, %cst_14 [0] : vector<8x8xf32> to vector<8xf32>
    %85 = vector.shape_cast %84 : vector<8xf32> to vector<1x8xf32>
    %86 = tpu.concatenate %82, %85 in 0 : vector<1x8xf32>, vector<1x8xf32> -> vector<2x8xf32>
    %87 = tpu.concatenate %40, %86 in 1 : vector<2x8xf32>, vector<2x8xf32> -> vector<2x16xf32>
    %cst_15 = arith.constant dense<0.000000e+00> : vector<2x16xf32>
    %88 = tpu.matmul %87, %13, %cst_15 {dimension_numbers = #tpu.dot_dimension_numbers<[1], [0], [0], [1], [0, 0, 1, 1], [], []>} : vector<2x16xf32>, vector<16x16xf32>, vector<2x16xf32> -> vector<2x16xf32>
    %cst_16 = arith.constant 0.000000e+00 : f32
    %89 = vector.broadcast %cst_16 : f32 to vector<2x16xf32>
    %90 = arith.maximumf %88, %89 : vector<2x16xf32>
    %c0_17 = arith.constant 0 : index
    %c0_18 = arith.constant 0 : index
    %91 = vector.load %arg1[%c0_17, %c0_18] : memref<2x16xf32, #tpu.memory_space<vmem>>, vector<2x16xf32>
    tpu.vector_store %arg1[%c0_17, %c0_18], %90 {strides = array<i32>} : memref<2x16xf32, #tpu.memory_space<vmem>>, vector<2x16xf32>,
    return
  }
}

</mosaic_0001>

<llo_original>
// kernel: run_model.1
$region0: #{run_model.1}
  #allocation0 [shape = 'u32[]', space=smem, size = 0x4, offset = 0x4, fixed_abs, tag = 'smem constant byte address 0x4 - core index']
  #allocation1 [shape = 'u32[144,128]{1,0:T(1,128)}', space=vmem, size = 0x12000, scoped, tag = 'internal scratch']
  %s0 = inlined_call_operand.vmem [shape: f32[56,16], index: 0, kind: input, shape index: {}]
  %s1 = inlined_call_operand.hbm [shape: f32[2,16], index: 1, kind: output, shape index: {}]
  %s2 = sld [smem:[#allocation0]]
  $region14: #{run_model.1} parent=0
    _
  %s4 = ssub.s32 1, %s2
  %s5 = scalar_select 0, %s4, %s2
  $region1: #{run_model.1} parent=0
    #allocation2 [shape = 'u8[1024]{0}', space=vmem, size = 0x400, scoped, tag = 'output window, operand 0, single buffered']
    #allocation3 [shape = 's32[1]{0}', space=sflag, size = 0x4, scoped, tag = 'scoped memory for run_model.1']
    %6 = vsyncpa [#allocation3], 0
    // Predicated region
    $region2: #{run_model.1} parent=1 // pred_check
      _
    $region3: #{run_model.1} parent=1 // pred_check_branch
      %8 = sbr.rel (0) target = $region5
    $region4: #{run_model.1} parent=1 // pred_region
      _
    $region5: #{run_model.1} parent=1 // pred_fallthru
      _
    %v9 = vld [vmem:[%s0] sm:$0xff]
    %v10 = vld [vmem:[%s0 + $0x8] sm:$0xff]
    %v11 = vld [vmem:[%s0 + $0x10] sm:$0x3]
    %v12 = vld [vmem:[%s0 + $0x18] sm:$0xf]
    %v13 = vld [vmem:[%s0 + $0x1c] sm:$0x1]
    %v14 = vld [vmem:[%s0 + $0x20] sm:$0xff]
    %v15 = vld [vmem:[%s0 + $0x28] sm:$0xff]
    %v16 = vld [vmem:[%s0 + $0x30] sm:$0xff]
    %v17 = vand.u32 2147483647, %v9
    %v18 = vand.u32 2147483647, %v10
    %v19 = vand.u32 2147483647, %v11
    %21 = vset.pattern.permute.xlu0 0
    %22 = vperm.xlu0 %21, %v17
    %v23 = vpop.permute.xlu0 %22
    %26 = vset.pattern.permute.xlu0 0
    %27 = vperm.xlu0 %26, %v18
    %v28 = vpop.permute.xlu0 %27
    %31 = vset.pattern.permute.xlu0 0
    %32 = vperm.xlu0 %31, %v19
    %v33 = vpop.permute.xlu0 %32
    %v35 = vlaneseq
    %v36 = vshrl.u32 %v35, 7
    %v37 = vsub.s32 0, %v36
    %v38 = vrot.slane %v12, %v37
    %v39 = vmul.f32 %v23, %v38
    %v40 = vmul.f32 %v28, %v38
    %v41 = vmul.f32 %v33, %v38
    %v42 = vlaneseq
    %v43 = vshrl.u32 %v42, 7
    %v44 = vsub.s32 1, %v43
    %v45 = vrot.slane %v12, %v44
    %v46 = vadd.f32 %v39, %v45
    %v47 = vadd.f32 %v40, %v45
    %v48 = vadd.f32 %v41, %v45
    %v49 = vlaneseq
    %v50 = vand.u32 %v49, 127
    %vm51 = vcmp.eq.s32.totalorder %v50, 0
    %v52 = vand.u32 2147483647, %v46
    %vm53 = vcmp.le.f32.partialorder %v52, 0.7853982
    %vm54 = vcmp.lt.s32.totalorder %v46, 0
    %v55 = vand.u32 %v46, 2139095040
    %v56 = vshrl.u32 %v55, 23
    %v57 = vsub.s32 %v56, 127
    %v58 = vand.u32 2147483647, %v46
    %v59 = vand.u32 %v58, 8388607
    %v60 = vor.u32 %v59, 8388608
    %v61 = vsub.s32 0, %v60
    %v62 = vadd.s32 %v57, 1
    %vm63 = vcmp.gt.s32.totalorder %v62, 0
    %v64 = vsel %vm63, %v62, 0
    %v65 = vshrl.u32 %v64, 5
    %v66 = vand.u32 %v64, 31
    %v67 = vsub.s32 32, %v66
    %v68 = vshrl.u32 683565275, %v67
    %v69 = vshll.u32 683565275, %v66
    %v70 = vshrl.u32 2475754826, %v67
    %v71 = vor.u32 %v69, %v70
    %v72 = vshll.u32 2475754826, %v66
    %v73 = vshrl.u32 2131351028, %v67
    %v74 = vor.u32 %v72, %v73
    %v75 = vshll.u32 2131351028, %v66
    %v76 = vshrl.u32 2102212464, %v67
    %v77 = vor.u32 %v75, %v76
    %v78 = vshll.u32 2102212464, %v66
    %v79 = vshrl.u32 920167782, %v67
    %v80 = vor.u32 %v78, %v79
    %v81 = vshll.u32 920167782, %v66
    %v82 = vshrl.u32 1326507024, %v67
    %v83 = vor.u32 %v81, %v82
    %vm84 = vcmp.lt.s32.totalorder %v65, 1
    %vm85 = vcmp.lt.s32.totalorder %v65, 2
    %vm86 = vcmp.lt.s32.totalorder %v65, 3
    %vm87 = vcmp.lt.s32.totalorder %v65, 4
    %v88 = vsel %vm84, %v68, %v71
    %v89 = vsel %vm87, %v77, 2102212464
    %v90 = vsel %vm86, %v74, %v89
    %v91 = vsel %vm85, %v88, %v90
    %v92 = vsel %vm84, %v71, %v74
    %v93 = vsel %vm87, %v80, 920167782
    %v94 = vsel %vm86, %v77, %v93
    %v95 = vsel %vm85, %v92, %v94
    %v96 = vsel %vm84, %v74, %v77
    %v97 = vsel %vm87, %v83, 1326507024
    %v98 = vsel %vm86, %v80, %v97
    %v99 = vsel %vm85, %v96, %v98
    %v100 = vshll.u32 %v60, 8
    %v101 = vmul.u32.u64.compose %v100, %v99
    %v102 = vextract.low.u32 %v101
    %v103 = vextract.high.u32 %v101
    %v104 = vmul.u32.u64.compose %v100, %v95
    %v105 = vextract.low.u32 %v104
    %v106 = vextract.high.u32 %v104
    %v107 = vmul.u32 %v100, %v91
    %v108 = vadd.s32 %v103, %v105
    %vm109 = vc.u32 %v103, %v105
    %v110 = vadd.s32 %v106, 1
    %v111 = vsel %vm109, %v110, %v106
    %v112 = vadd.s32 %v107, %v111
    %v113 = vadd.s32 %v112, 536870912
    %v114 = vshrl.u32 %v113, 30
    %v115 = vshll.u32 %v114, 30
    %v116 = vsub.s32 %v112, %v115
    %vm117 = vcmp.lt.s32.totalorder %v116, 0
    %v118 = vsub.s32 0, %v116
    %v119 = vsel %vm117, %v118, %v116
    %v120 = vclz %v119
    %v121 = vsub.s32 %v120, 2
    %vm122 = vcmp.gt.s32.totalorder 0, %v121
    %v123 = vsel %vm122, 0, %v121
    %v124 = vsub.s32 32, %v123
    %v125 = vshll.u32 %v116, %v123
    %v126 = vshrl.u32 %v108, %v124
    %v127 = vor.u32 %v125, %v126
    %v128 = vsub.s32 4294967266, %v123
    %v129 = vadd.s32 %v128, 127
    %v130 = vshll.u32 %v129, 23
    %v131 = vor.u32 4788187, %v130
    %v132 = vand.u32 2147483647, %v131
    %v134 = vcvt.s32.f32 %v127
    %v135 = vmul.f32 %v134, %v132
    %v136 = vxor.u32 %v135, 2147483648
    %v137 = vsel %vm54, %v136, %v135
    %v138 = vsub.s32 4, %v114
    %v139 = vsel %vm54, %v138, %v114
    %v140 = vsel %vm53, %v46, %v137
    %v141 = vsel %vm53, 0, %v139
    %v142 = vcosq.f32.pop %v140
    %v143 = vsinq.f32.pop %v140
    %vm144 = vweird.f32 %v46
    %v145 = vand.u32 %v141, 3
    %vm146 = vcmp.lt.s32.totalorder %v145, 2
    %vm147 = vcmp.eq.s32.totalorder %v145, 0
    %v148 = vxor.u32 %v143, 2147483648
    %v149 = vsel %vm147, %v142, %v148
    %vm150 = vcmp.eq.s32.totalorder %v145, 2
    %v151 = vxor.u32 %v142, 2147483648
    %v152 = vsel %vm150, %v151, %v143
    %v153 = vsel %vm146, %v149, %v152
    %v154 = vsel %vm144, nan, %v153
    %v155 = vand.u32 2147483647, %v47
    %vm156 = vcmp.le.f32.partialorder %v155, 0.7853982
    %vm157 = vcmp.lt.s32.totalorder %v47, 0
    %v158 = vand.u32 %v47, 2139095040
    %v159 = vshrl.u32 %v158, 23
    %v160 = vsub.s32 %v159, 127
    %v161 = vand.u32 2147483647, %v47
    %v162 = vand.u32 %v161, 8388607
    %v163 = vor.u32 %v162, 8388608
    %v164 = vsub.s32 0, %v163
    %v165 = vadd.s32 %v160, 1
    %vm166 = vcmp.gt.s32.totalorder %v165, 0
    %v167 = vsel %vm166, %v165, 0
    %v168 = vshrl.u32 %v167, 5
    %v169 = vand.u32 %v167, 31
    %v170 = vsub.s32 32, %v169
    %v171 = vshrl.u32 683565275, %v170
    %v172 = vshll.u32 683565275, %v169
    %v173 = vshrl.u32 2475754826, %v170
    %v174 = vor.u32 %v172, %v173
    %v175 = vshll.u32 2475754826, %v169
    %v176 = vshrl.u32 2131351028, %v170
    %v177 = vor.u32 %v175, %v176
    %v178 = vshll.u32 2131351028, %v169
    %v179 = vshrl.u32 2102212464, %v170
    %v180 = vor.u32 %v178, %v179
    %v181 = vshll.u32 2102212464, %v169
    %v182 = vshrl.u32 920167782, %v170
    %v183 = vor.u32 %v181, %v182
    %v184 = vshll.u32 920167782, %v169
    %v185 = vshrl.u32 1326507024, %v170
    %v186 = vor.u32 %v184, %v185
    %vm187 = vcmp.lt.s32.totalorder %v168, 1
    %vm188 = vcmp.lt.s32.totalorder %v168, 2
    %vm189 = vcmp.lt.s32.totalorder %v168, 3
    %vm190 = vcmp.lt.s32.totalorder %v168, 4
    %v191 = vsel %vm187, %v171, %v174
    %v192 = vsel %vm190, %v180, 2102212464
    %v193 = vsel %vm189, %v177, %v192
    %v194 = vsel %vm188, %v191, %v193
    %v195 = vsel %vm187, %v174, %v177
    %v196 = vsel %vm190, %v183, 920167782
    %v197 = vsel %vm189, %v180, %v196
    %v198 = vsel %vm188, %v195, %v197
    %v199 = vsel %vm187, %v177, %v180
    %v200 = vsel %vm190, %v186, 1326507024
    %v201 = vsel %vm189, %v183, %v200
    %v202 = vsel %vm188, %v199, %v201
    %v203 = vshll.u32 %v163, 8
    %v204 = vmul.u32.u64.compose %v203, %v202
    %v205 = vextract.low.u32 %v204
    %v206 = vextract.high.u32 %v204
    %v207 = vmul.u32.u64.compose %v203, %v198
    %v208 = vextract.low.u32 %v207
    %v209 = vextract.high.u32 %v207
    %v210 = vmul.u32 %v203, %v194
    %v211 = vadd.s32 %v206, %v208
    %vm212 = vc.u32 %v206, %v208
    %v213 = vadd.s32 %v209, 1
    %v214 = vsel %vm212, %v213, %v209
    %v215 = vadd.s32 %v210, %v214
    %v216 = vadd.s32 %v215, 536870912
    %v217 = vshrl.u32 %v216, 30
    %v218 = vshll.u32 %v217, 30
    %v219 = vsub.s32 %v215, %v218
    %vm220 = vcmp.lt.s32.totalorder %v219, 0
    %v221 = vsub.s32 0, %v219
    %v222 = vsel %vm220, %v221, %v219
    %v223 = vclz %v222
    %v224 = vsub.s32 %v223, 2
    %vm225 = vcmp.gt.s32.totalorder 0, %v224
    %v226 = vsel %vm225, 0, %v224
    %v227 = vsub.s32 32, %v226
    %v228 = vshll.u32 %v219, %v226
    %v229 = vshrl.u32 %v211, %v227
    %v230 = vor.u32 %v228, %v229
    %v231 = vsub.s32 4294967266, %v226
    %v232 = vadd.s32 %v231, 127
    %v233 = vshll.u32 %v232, 23
    %v234 = vor.u32 4788187, %v233
    %v235 = vand.u32 2147483647, %v234
    %v237 = vcvt.s32.f32 %v230
    %v238 = vmul.f32 %v237, %v235
    %v239 = vxor.u32 %v238, 2147483648
    %v240 = vsel %vm157, %v239, %v238
    %v241 = vsub.s32 4, %v217
    %v242 = vsel %vm157, %v241, %v217
    %v243 = vsel %vm156, %v47, %v240
    %v244 = vsel %vm156, 0, %v242
    %v245 = vcosq.f32.pop %v243
    %v246 = vsinq.f32.pop %v243
    %vm247 = vweird.f32 %v47
    %v248 = vand.u32 %v244, 3
    %vm249 = vcmp.lt.s32.totalorder %v248, 2
    %vm250 = vcmp.eq.s32.totalorder %v248, 0
    %v251 = vxor.u32 %v246, 2147483648
    %v252 = vsel %vm250, %v245, %v251
    %vm253 = vcmp.eq.s32.totalorder %v248, 2
    %v254 = vxor.u32 %v245, 2147483648
    %v255 = vsel %vm253, %v254, %v246
    %v256 = vsel %vm249, %v252, %v255
    %v257 = vsel %vm247, nan, %v256
    %v258 = vand.u32 2147483647, %v48
    %vm259 = vcmp.le.f32.partialorder %v258, 0.7853982
    %vm260 = vcmp.lt.s32.totalorder %v48, 0
    %v261 = vand.u32 %v48, 2139095040
    %v262 = vshrl.u32 %v261, 23
    %v263 = vsub.s32 %v262, 127
    %v264 = vand.u32 2147483647, %v48
    %v265 = vand.u32 %v264, 8388607
    %v266 = vor.u32 %v265, 8388608
    %v267 = vsub.s32 0, %v266
    %v268 = vadd.s32 %v263, 1
    %vm269 = vcmp.gt.s32.totalorder %v268, 0
    %v270 = vsel %vm269, %v268, 0
    %v271 = vshrl.u32 %v270, 5
    %v272 = vand.u32 %v270, 31
    %v273 = vsub.s32 32, %v272
    %v274 = vshrl.u32 683565275, %v273
    %v275 = vshll.u32 683565275, %v272
    %v276 = vshrl.u32 2475754826, %v273
    %v277 = vor.u32 %v275, %v276
    %v278 = vshll.u32 2475754826, %v272
    %v279 = vshrl.u32 2131351028, %v273
    %v280 = vor.u32 %v278, %v279
    %v281 = vshll.u32 2131351028, %v272
    %v282 = vshrl.u32 2102212464, %v273
    %v283 = vor.u32 %v281, %v282
    %v284 = vshll.u32 2102212464, %v272
    %v285 = vshrl.u32 920167782, %v273
    %v286 = vor.u32 %v284, %v285
    %v287 = vshll.u32 920167782, %v272
    %v288 = vshrl.u32 1326507024, %v273
    %v289 = vor.u32 %v287, %v288
    %vm290 = vcmp.lt.s32.totalorder %v271, 1
    %vm291 = vcmp.lt.s32.totalorder %v271, 2
    %vm292 = vcmp.lt.s32.totalorder %v271, 3
    %vm293 = vcmp.lt.s32.totalorder %v271, 4
    %v294 = vsel %vm290, %v274, %v277
    %v295 = vsel %vm293, %v283, 2102212464
    %v296 = vsel %vm292, %v280, %v295
    %v297 = vsel %vm291, %v294, %v296
    %v298 = vsel %vm290, %v277, %v280
    %v299 = vsel %vm293, %v286, 920167782
    %v300 = vsel %vm292, %v283, %v299
    %v301 = vsel %vm291, %v298, %v300
    %v302 = vsel %vm290, %v280, %v283
    %v303 = vsel %vm293, %v289, 1326507024
    %v304 = vsel %vm292, %v286, %v303
    %v305 = vsel %vm291, %v302, %v304
    %v306 = vshll.u32 %v266, 8
    %v307 = vmul.u32.u64.compose %v306, %v305
    %v308 = vextract.low.u32 %v307
    %v309 = vextract.high.u32 %v307
    %v310 = vmul.u32.u64.compose %v306, %v301
    %v311 = vextract.low.u32 %v310
    %v312 = vextract.high.u32 %v310
    %v313 = vmul.u32 %v306, %v297
    %v314 = vadd.s32 %v309, %v311
    %vm315 = vc.u32 %v309, %v311
    %v316 = vadd.s32 %v312, 1
    %v317 = vsel %vm315, %v316, %v312
    %v318 = vadd.s32 %v313, %v317
    %v319 = vadd.s32 %v318, 536870912
    %v320 = vshrl.u32 %v319, 30
    %v321 = vshll.u32 %v320, 30
    %v322 = vsub.s32 %v318, %v321
    %vm323 = vcmp.lt.s32.totalorder %v322, 0
    %v324 = vsub.s32 0, %v322
    %v325 = vsel %vm323, %v324, %v322
    %v326 = vclz %v325
    %v327 = vsub.s32 %v326, 2
    %vm328 = vcmp.gt.s32.totalorder 0, %v327
    %v329 = vsel %vm328, 0, %v327
    %v330 = vsub.s32 32, %v329
    %v331 = vshll.u32 %v322, %v329
    %v332 = vshrl.u32 %v314, %v330
    %v333 = vor.u32 %v331, %v332
    %v334 = vsub.s32 4294967266, %v329
    %v335 = vadd.s32 %v334, 127
    %v336 = vshll.u32 %v335, 23
    %v337 = vor.u32 4788187, %v336
    %v338 = vand.u32 2147483647, %v337
    %v340 = vcvt.s32.f32 %v333
    %v341 = vmul.f32 %v340, %v338
    %v342 = vxor.u32 %v341, 2147483648
    %v343 = vsel %vm260, %v342, %v341
    %v344 = vsub.s32 4, %v320
    %v345 = vsel %vm260, %v344, %v320
    %v346 = vsel %vm259, %v48, %v343
    %v347 = vsel %vm259, 0, %v345
    %v348 = vcosq.f32.pop %v346
    %v349 = vsinq.f32.pop %v346
    %vm350 = vweird.f32 %v48
    %v351 = vand.u32 %v347, 3
    %vm352 = vcmp.lt.s32.totalorder %v351, 2
    %vm353 = vcmp.eq.s32.totalorder %v351, 0
    %v354 = vxor.u32 %v349, 2147483648
    %v355 = vsel %vm353, %v348, %v354
    %vm356 = vcmp.eq.s32.totalorder %v351, 2
    %v357 = vxor.u32 %v348, 2147483648
    %v358 = vsel %vm356, %v357, %v349
    %v359 = vsel %vm352, %v355, %v358
    %v360 = vsel %vm350, nan, %v359
    %v361 = vsel %vm51, %v46, %v154
    %v362 = vsel %vm51, %v47, %v257
    %v363 = vsel %vm51, %v48, %v360
    %367 = vrot.lane.b32.xlu0 %v9, 127
    %v368 = vpop.permute.xlu0 %367
    %369 = vrot.lane.b32.xlu0 %v10, 127
    %v370 = vpop.permute.xlu0 %369
    %371 = vrot.lane.b32.xlu0 %v11, 127
    %v372 = vpop.permute.xlu0 %371
    %v376 = vadd.f32 %v9, %v368
    %v377 = vadd.f32 %v10, %v370
    %v378 = vadd.f32 %v11, %v372
    %380 = vset.pattern.permute.xlu0 1
    %381 = vperm.xlu0 %380, %v376
    %v382 = vpop.permute.xlu0 %381
    %385 = vset.pattern.permute.xlu0 1
    %386 = vperm.xlu0 %385, %v377
    %v387 = vpop.permute.xlu0 %386
    %390 = vset.pattern.permute.xlu0 1
    %391 = vperm.xlu0 %390, %v378
    %v392 = vpop.permute.xlu0 %391
    %v394 = vlaneseq
    %v395 = vshrl.u32 %v394, 7
    %v396 = vsub.s32 2, %v395
    %v397 = vrot.slane %v12, %v396
    %v398 = vmul.f32 %v382, %v397
    %v399 = vmul.f32 %v387, %v397
    %v400 = vmul.f32 %v392, %v397
    %v401 = vadd.f32 %v361, %v398
    %v402 = vadd.f32 %v362, %v399
    %v403 = vadd.f32 %v363, %v400
    %v404 = vlaneseq
    %v405 = vshrl.u32 %v404, 7
    %v406 = vsub.s32 3, %v405
    %v407 = vrot.slane %v12, %v406
    %v408 = vadd.f32 %v401, %v407
    %v409 = vadd.f32 %v402, %v407
    %v410 = vadd.f32 %v403, %v407
    %v411 = vmul.f32 %v408, %v408
    %v412 = vmul.f32 %v409, %v409
    %v413 = vmul.f32 %v410, %v410
    %vm414 = vcmask 64512
    %v415 = vsel %vm414, %v411, 0.0
    %416 = vadd.xlane.f32.xlu0 %v415
    %v417 = vpop.xlane.xlu0 %416
    %v418 = vsel %vm414, %v412, 0.0
    %419 = vadd.xlane.f32.xlu0 %v418
    %v420 = vpop.xlane.xlu0 %419
    %vm421 = vcmask 58368
    %v422 = vsel %vm421, %v413, 0.0
    %423 = vadd.xlane.f32.xlu0 %v422
    %v424 = vpop.xlane.xlu0 %423
    %v425 = vrsqrt.pop %v417
    %v426 = vmul.f32 %v417, %v425
    %vm427 = vcmp.eq.f32.partialorder %v417, inf
    %v428 = vsel %vm427, %v417, %v426
    %vm429 = vcmp.eq.f32.partialorder %v417, 0.0
    %v430 = vand.u32 %v417, 2147483648
    %v431 = vsel %vm429, %v430, %v428
    %v432 = vrsqrt.pop %v420
    %v433 = vmul.f32 %v420, %v432
    %vm434 = vcmp.eq.f32.partialorder %v420, inf
    %v435 = vsel %vm434, %v420, %v433
    %vm436 = vcmp.eq.f32.partialorder %v420, 0.0
    %v437 = vand.u32 %v420, 2147483648
    %v438 = vsel %vm436, %v437, %v435
    %v439 = vrsqrt.pop %v424
    %v440 = vmul.f32 %v424, %v439
    %vm441 = vcmp.eq.f32.partialorder %v424, inf
    %v442 = vsel %vm441, %v424, %v440
    %vm443 = vcmp.eq.f32.partialorder %v424, 0.0
    %v444 = vand.u32 %v424, 2147483648
    %v445 = vsel %vm443, %v444, %v442
    %v446 = vmax.f32 %v431, 1e-12
    %v447 = vmax.f32 %v438, 1e-12
    %v448 = vmax.f32 %v445, 1e-12
    %v449 = vrcp.pop %v446
    %v450 = vmul.f32 %v408, %v449
    %v451 = vrcp.pop %v447
    %v452 = vmul.f32 %v409, %v451
    %v453 = vrcp.pop %v448
    %v454 = vmul.f32 %v410, %v453
    %v456 = vsel %vm414, %v450, 0
    %v459 = vsel %vm414, %v452, 0
    %v462 = vsel %vm414, %v454, 0
    %464 = vmatprep.subr.mxu0 0.0
    %465 = vmatpush1.msra.mxu0 %v14
    %466 = vmatprep.subr.mxu0 0.0
    %467 = vmatpush1.msra.mxu0 0.0
    %468 = vmatprep.subr.mxu0 0.0
    %469 = vmatpush1.msra.mxu0 0.0
    %470 = vmatprep.subr.mxu0 0.0
    %471 = vmatpush1.msra.mxu0 0.0
    %472 = vmatprep.subr.mxu0 0.0
    %473 = vmatpush1.msra.mxu0 0.0
    %474 = vmatprep.subr.mxu0 0.0
    %475 = vmatpush1.msra.mxu0 0.0
    %476 = vmatprep.subr.mxu0 0.0
    %477 = vmatpush1.msra.mxu0 0.0
    %478 = vmatprep.subr.mxu0 0.0
    %479 = vmatpush1.msra.mxu0 0.0
    %480 = vmatprep.subr.mxu0 0.0
    %481 = vmatpush1.msra.mxu0 0.0
    %482 = vmatprep.subr.mxu0 0.0
    %483 = vmatpush1.msra.mxu0 0.0
    %484 = vmatprep.subr.mxu0 0.0
    %485 = vmatpush1.msra.mxu0 0.0
    %486 = vmatprep.subr.mxu0 0.0
    %487 = vmatpush1.msra.mxu0 0.0
    %488 = vmatprep.subr.mxu0 0.0
    %489 = vmatpush1.msra.mxu0 0.0
    %490 = vmatprep.subr.mxu0 0.0
    %491 = vmatpush1.msra.mxu0 0.0
    %492 = vmatprep.subr.mxu0 0.0
    %493 = vmatpush1.msra.mxu0 0.0
    %494 = vmatprep.subr.mxu0 0.0
    %495 = vmatpush1.msra.mxu0 0.0
    %496 = vmatprep.subr.mxu0 0.0
    %497 = vmatpush1.msra.mxu0 0.0
    %498 = vmatprep.subr.mxu0 0.0
    %499 = vmatpush1.msra.mxu0 0.0
    %500 = vmatprep.subr.mxu0 0.0
    %501 = vmatpush1.msra.mxu0 0.0
    %502 = vmatprep.subr.mxu0 0.0
    %503 = vmatpush1.msra.mxu0 0.0
    %504 = vmatprep.subr.mxu0 0.0
    %505 = vmatpush1.msra.mxu0 0.0
    %506 = vmatprep.subr.mxu0 0.0
    %507 = vmatpush1.msra.mxu0 0.0
    %508 = vmatprep.subr.mxu0 0.0
    %509 = vmatpush1.msra.mxu0 0.0
    %510 = vmatprep.subr.mxu0 0.0
    %511 = vmatpush1.msra.mxu0 0.0
    %512 = vmatprep.subr.mxu0 0.0
    %513 = vmatpush1.msra.mxu0 0.0
    %514 = vmatprep.subr.mxu0 0.0
    %515 = vmatpush1.msra.mxu0 0.0
    %516 = vmatprep.subr.mxu0 0.0
    %517 = vmatpush1.msra.mxu0 0.0
    %518 = vmatprep.subr.mxu0 0.0
    %519 = vmatpush1.msra.mxu0 0.0
    %520 = vmatprep.subr.mxu0 0.0
    %521 = vmatpush1.msra.mxu0 0.0
    %522 = vmatprep.subr.mxu0 0.0
    %523 = vmatpush1.msra.mxu0 0.0
    %524 = vmatprep.subr.mxu0 0.0
    %525 = vmatpush1.msra.mxu0 0.0
    %526 = vmatprep.subr.mxu0 0.0
    %527 = vmatpush1.msra.mxu0 0.0
    %528 = vmatprep.mubr.f32.mxu0 0.0
    %529 = vmatmul.mubr.f32.gmra.mrb[0].mxu0 %v456
    %v530 = vpop.f32.mrb[0].mxu0
    %v531 = vadd.f32 0.0, %v530
    %v532 = vpop.f32.mrb[0].mxu0
    %533 = vmatprep.mubr.f32.mxu0 0.0
    %534 = vmatmul.mubr.f32.gmra.mrb[0].mxu0 %v459
    %v535 = vpop.f32.mrb[0].mxu0
    %v536 = vadd.f32 0.0, %v535
    %v537 = vpop.f32.mrb[0].mxu0
    %538 = vmatprep.mubr.f32.mxu0 0.0
    %539 = vmatmul.mubr.f32.gmra.mrb[0].mxu0 %v462
    %v540 = vpop.f32.mrb[0].mxu0
    %v541 = vadd.f32 0.0, %v540
    %v542 = vpop.f32.mrb[0].mxu0
    %543 = vdwg.mxu0
    %v544 = vlaneseq
    %v545 = vshrl.u32 %v544, 7
    %v546 = vadd.s32 %v545, 8
    %vm547 = vcmp.lt.s32.totalorder %v545, 8
    %vm548 = vcmp.lt.s32.totalorder %v546, 8
    %v549 = vlaneseq
    %v550 = vshrl.u32 %v549, 7
    %v551 = vsub.s32 0, %v550
    %v552 = vrot.slane %v531, %v551
    %v553 = vlaneseq
    %v554 = vshrl.u32 %v553, 7
    %v555 = vsub.s32 1, %v554
    %v556 = vrot.slane %v531, %v555
    %v557 = vsel %vm547, %v552, %v556
    %v558 = vsel %vm548, %v552, %v556
    %vm562 = vcmask 1045504
    %v563 = vrot.slane %v531, 2
    %v564 = vrot.slane %v536, 2
    %v565 = vsel %vm562, %v563, %v564
    %v566 = vrot.slane %v541, 2
    %v567 = vsel %vm562, %v564, %v566
    %568 = vrot.lane.b32.xlu0 %v565, 120
    %v569 = vpop.permute.xlu0 %568
    %570 = vrot.lane.b32.xlu0 %v567, 120
    %v571 = vpop.permute.xlu0 %570
    %v574 = vadd.f32 %v557, %v569
    %v575 = vadd.f32 %v558, %v571
    %v576 = vtanh.pop %v574
    %v577 = vtanh.pop %v575
    %v578 = vlaneseq
    %v579 = vshrl.u32 %v578, 7
    %v580 = vsub.s32 0, %v579
    %v581 = vrot.slane %v13, %v580
    %v582 = vmul.f32 %v576, %v581
    %v583 = vmul.f32 %v577, %v581
    %v584 = vsel %vm414, %v582, 0.0
    %585 = vadd.xlane.f32.xlu0 %v584
    %v586 = vpop.xlane.xlu0 %585
    %v587 = vsel %vm414, %v583, 0.0
    %588 = vadd.xlane.f32.xlu0 %v587
    %v589 = vpop.xlane.xlu0 %588
    %v590 = vmul.f32 %v9, 2.0
    %v591 = vmul.f32 %v10, 2.0
    %v592 = vmul.f32 %v11, 2.0
    %v593 = vadd.f32 %v590, 1.0
    %v594 = vadd.f32 %v591, 1.0
    %v595 = vadd.f32 %v592, 1.0
    %v596 = vrcp.pop %v593
    %v597 = vmul.f32 1.0, %v596
    %v598 = vrcp.pop %v594
    %v599 = vmul.f32 1.0, %v598
    %v600 = vrcp.pop %v595
    %v601 = vmul.f32 1.0, %v600
    %vm602 = vcmp.ge.f32.partialorder %v597, 0.0
    %vm603 = vcmp.ge.f32.partialorder %v599, 0.0
    %vm604 = vcmp.ge.f32.partialorder %v601, 0.0
    %v605 = vmul.f32 %v597, 0.01
    %v606 = vmul.f32 %v599, 0.01
    %v607 = vmul.f32 %v601, 0.01
    %v608 = vsel %vm602, %v597, %v605
    %v609 = vsel %vm603, %v599, %v606
    %v610 = vsel %vm604, %v601, %v607
    %611 = vrot.lane.b32.xlu0 %v9, 125
    %v612 = vpop.permute.xlu0 %611
    %613 = vrot.lane.b32.xlu0 %v10, 125
    %v614 = vpop.permute.xlu0 %613
    %615 = vrot.lane.b32.xlu0 %v11, 125
    %v616 = vpop.permute.xlu0 %615
    %v620 = vmul.f32 %v608, %v612
    %v621 = vmul.f32 %v609, %v614
    %v622 = vmul.f32 %v610, %v616
    %623 = vrot.lane.b32.xlu0 %v9, 124
    %v624 = vpop.permute.xlu0 %623
    %625 = vrot.lane.b32.xlu0 %v10, 124
    %v626 = vpop.permute.xlu0 %625
    %627 = vrot.lane.b32.xlu0 %v11, 124
    %v628 = vpop.permute.xlu0 %627
    %v632 = vrcp.pop %v624
    %v633 = vmul.f32 %v620, %v632
    %v634 = vrcp.pop %v626
    %v635 = vmul.f32 %v621, %v634
    %v636 = vrcp.pop %v628
    %v637 = vmul.f32 %v622, %v636
    %vm640 = vcmask 1041408
    %v641 = vrot.slane %v586, 6
    %v642 = vrot.slane %v589, 6
    %v643 = vsel %vm640, %v641, %v642
    %v647 = vmul.f32 %v633, %v641
    %v648 = vmul.f32 %v635, %v643
    %v649 = vmul.f32 %v637, %v642
    %651 = vset.pattern.permute.xlu0 0
    %652 = vperm.xlu0 %651, %v647
    %v653 = vpop.permute.xlu0 %652
    %656 = vset.pattern.permute.xlu0 0
    %657 = vperm.xlu0 %656, %v648
    %v658 = vpop.permute.xlu0 %657
    %661 = vset.pattern.permute.xlu0 0
    %662 = vperm.xlu0 %661, %v649
    %v663 = vpop.permute.xlu0 %662
    %v665 = vmul.f32 %v653, %v450
    %v666 = vmul.f32 %v658, %v452
    %v667 = vmul.f32 %v663, %v454
    %v670 = vrot.slane %v665, 2
    %v671 = vrot.slane %v666, 2
    %v672 = vsel %vm562, %v670, %v671
    %v674 = vsel %vm414, %v672, 0.0
    %v675 = vrot.slane %v674, 4
    %v676 = vadd.f32 %v674, %v675
    %v677 = vrot.slane %v676, 2
    %v678 = vadd.f32 %v676, %v677
    %v679 = vrot.slane %v678, 1
    %v680 = vadd.f32 %v678, %v679
    %v682 = vrot.slane %v667, 2
    %v683 = vsel %vm562, %v671, %v682
    %v685 = vsel %vm414, %v683, 0.0
    %v686 = vrot.slane %v685, 4
    %v687 = vadd.f32 %v685, %v686
    %v688 = vrot.slane %v687, 2
    %v689 = vadd.f32 %v687, %v688
    %v690 = vrot.slane %v689, 1
    %v691 = vadd.f32 %v689, %v690
    %vm692 = vcmask 1040384
    %v693 = vsel %vm692, %v680, %v691
    %695 = vrot.lane.b32.xlu0 %v693, 8
    %v696 = vpop.permute.xlu0 %695
    %v698 = vsel %vm414, %v450, %v696
    %vm699 = vcmask 130048
    %v701 = vsel %vm699, %v698, 0
    %703 = vmatprep.subr.mxu0 0.0
    %704 = vmatpush1.msra.mxu0 %v15
    %705 = vmatprep.subr.mxu0 0.0
    %706 = vmatpush1.msra.mxu0 %v16
    %707 = vmatprep.subr.mxu0 0.0
    %708 = vmatpush1.msra.mxu0 0.0
    %709 = vmatprep.subr.mxu0 0.0
    %710 = vmatpush1.msra.mxu0 0.0
    %711 = vmatprep.subr.mxu0 0.0
    %712 = vmatpush1.msra.mxu0 0.0
    %713 = vmatprep.subr.mxu0 0.0
    %714 = vmatpush1.msra.mxu0 0.0
    %715 = vmatprep.subr.mxu0 0.0
    %716 = vmatpush1.msra.mxu0 0.0
    %717 = vmatprep.subr.mxu0 0.0
    %718 = vmatpush1.msra.mxu0 0.0
    %719 = vmatprep.subr.mxu0 0.0
    %720 = vmatpush1.msra.mxu0 0.0
    %721 = vmatprep.subr.mxu0 0.0
    %722 = vmatpush1.msra.mxu0 0.0
    %723 = vmatprep.subr.mxu0 0.0
    %724 = vmatpush1.msra.mxu0 0.0
    %725 = vmatprep.subr.mxu0 0.0
    %726 = vmatpush1.msra.mxu0 0.0
    %727 = vmatprep.subr.mxu0 0.0
    %728 = vmatpush1.msra.mxu0 0.0
    %729 = vmatprep.subr.mxu0 0.0
    %730 = vmatpush1.msra.mxu0 0.0
    %731 = vmatprep.subr.mxu0 0.0
    %732 = vmatpush1.msra.mxu0 0.0
    %733 = vmatprep.subr.mxu0 0.0
    %734 = vmatpush1.msra.mxu0 0.0
    %735 = vmatprep.subr.mxu0 0.0
    %736 = vmatpush1.msra.mxu0 0.0
    %737 = vmatprep.subr.mxu0 0.0
    %738 = vmatpush1.msra.mxu0 0.0
    %739 = vmatprep.subr.mxu0 0.0
    %740 = vmatpush1.msra.mxu0 0.0
    %741 = vmatprep.subr.mxu0 0.0
    %742 = vmatpush1.msra.mxu0 0.0
    %743 = vmatprep.subr.mxu0 0.0
    %744 = vmatpush1.msra.mxu0 0.0
    %745 = vmatprep.subr.mxu0 0.0
    %746 = vmatpush1.msra.mxu0 0.0
    %747 = vmatprep.subr.mxu0 0.0
    %748 = vmatpush1.msra.mxu0 0.0
    %749 = vmatprep.subr.mxu0 0.0
    %750 = vmatpush1.msra.mxu0 0.0
    %751 = vmatprep.subr.mxu0 0.0
    %752 = vmatpush1.msra.mxu0 0.0
    %753 = vmatprep.subr.mxu0 0.0
    %754 = vmatpush1.msra.mxu0 0.0
    %755 = vmatprep.subr.mxu0 0.0
    %756 = vmatpush1.msra.mxu0 0.0
    %757 = vmatprep.subr.mxu0 0.0
    %758 = vmatpush1.msra.mxu0 0.0
    %759 = vmatprep.subr.mxu0 0.0
    %760 = vmatpush1.msra.mxu0 0.0
    %761 = vmatprep.subr.mxu0 0.0
    %762 = vmatpush1.msra.mxu0 0.0
    %763 = vmatprep.subr.mxu0 0.0
    %764 = vmatpush1.msra.mxu0 0.0
    %765 = vmatprep.subr.mxu0 0.0
    %766 = vmatpush1.msra.mxu0 0.0
    %767 = vmatprep.mubr.f32.mxu0 0.0
    %768 = vmatmul.mubr.f32.gmra.mrb[0].mxu0 %v701
    %v769 = vpop.f32.mrb[0].mxu0
    %v770 = vadd.f32 0.0, %v769
    %v771 = vpop.f32.mrb[0].mxu0
    %772 = vdwg.mxu0
    %v773 = vmax.f32 %v770, 0.0
    %vm774 = vcmask 123904
    %775 = vst.msk [vmem:[#allocation2] sm:$0x3] %vm774, %v773
    // Predicated region
    $region6: #{run_model.1} parent=1 // pred_check
      _
    $region7: #{run_model.1} parent=1 // pred_check_branch
      %777 = sbr.rel (0) target = $region9
    $region8: #{run_model.1} parent=1 // pred_region
      %s779 = ssub.s32 32, 32
      %780 = vsyncadd [#allocation3], %s779
      %s782 = sshll.u32 [#allocation2], 4
      %s783 = int_to_ptr.vmem [resolvable:$true] %s782
      %785 = dma.vmem_to_hbm [thread:$0]  %s783, 32, %s1, [#allocation3]
    $region9: #{run_model.1} parent=1 // pred_fallthru
      _
    // Predicated region
    $region10: #{run_model.1} parent=1 // pred_check
      _
    $region11: #{run_model.1} parent=1 // pred_check_branch
      %787 = sbr.rel (0) target = $region13
    $region12: #{run_model.1} parent=1 // pred_region
      %788 = dma.done [#allocation3], 32
    $region13: #{run_model.1} parent=1 // pred_fallthru
      _
    %789 = vsyncpa [#allocation3], 1

</llo_original>
